<compile_context>
chip_gen: v6e
topology: v6e:2x2x1
jax: 0.10.0
libtpu: 0.0.40
codegen_flags: <defaults>
</compile_context>

<pallas_src>
import functools

import jax
import jax.numpy as jnp
from jax import lax
from jax.experimental import pallas as pl
from jax.experimental.pallas import tpu as pltpu


def focal_loss_kernel(out_ref, tgt_ref, alpha_ref, loss_ref, *, gamma, n_total):
    i = pl.program_id(0)

    @pl.when(i == 0)
    def _init():
        loss_ref[...] = jnp.zeros_like(loss_ref)

    x = out_ref[...].astype(jnp.float32)            # (TN, C) logits (cast in-kernel)
    tgt = tgt_ref[...]                              # (TN, 1) int32 targets
    alpha = alpha_ref[...].astype(jnp.float32)      # (1, C) or (TN, C)

    tn, c = x.shape

    # numerically stable log-softmax pieces along the class axis (dim=1)
    m = jnp.max(x, axis=1, keepdims=True)
    z = x - m
    s = jnp.sum(jnp.exp(z), axis=1, keepdims=True)
    log_s = jnp.log(s)

    # gather the target class via a one-hot mask (no dynamic gather on TPU)
    # NOTE: out-of-range targets give a zero mask -> zero contribution
    # (PyTorch gather would raise); handle ignore_index explicitly if needed.
    cls = lax.broadcasted_iota(jnp.int32, (tn, c), 1)
    onehot = cls == tgt                              # (TN, C)

    z_t = jnp.sum(jnp.where(onehot, z, 0.0), axis=1, keepdims=True)       # (TN, 1)
    alpha_t = jnp.sum(jnp.where(onehot, alpha, 0.0), axis=1, keepdims=True)

    log_pt = z_t - log_s                             # log_softmax at target
    pt = jnp.exp(log_pt)                             # softmax at target

    one_minus_pt = 1.0 - pt
    g = float(gamma)
    if g.is_integer() and 0.0 <= g <= 8.0:
        # repeated VPU multiplies instead of lax.pow (log+exp on the EUP)
        focus_p = jnp.ones_like(one_minus_pt)
        for _ in range(int(g)):
            focus_p = focus_p * one_minus_pt
    else:
        focus_p = jnp.power(one_minus_pt, g)

    weight_nll = alpha_t * focus_p * (-log_pt)       # (TN, 1)

    # mask padded tail rows (grid may overrun the true N)
    row = i * tn + lax.broadcasted_iota(jnp.int32, (tn, 1), 0)
    weight_nll = jnp.where(row < n_total, weight_nll, 0.0)

    loss_ref[...] += jnp.sum(weight_nll, axis=0, keepdims=True)

    @pl.when(i == pl.num_programs(0) - 1)
    def _finalize():
        loss_ref[...] = loss_ref[...] * jnp.float32(1.0 / n_total)


def _pick_tile_n(n, c, itemsize):
    # aim for ~2 MiB of logits per pipeline buffer; double-buffered inputs
    # then stay well inside the scoped-VMEM default on v5e/v6e/v7x.
    budget_bytes = 2 * 1024 * 1024
    tn = max(8, budget_bytes // max(1, c * itemsize))
    tn = max(8, (tn // 8) * 8)
    n_pad = ((n + 7) // 8) * 8
    return int(min(tn, n_pad))


def focal_loss(output, target, alpha_map, gamma, *, tile_n=None):
    output = jnp.asarray(output)
    n, c = output.shape

    alpha_map = jnp.asarray(alpha_map)
    if alpha_map.ndim == 1:
        alpha_map = alpha_map.reshape(1, c)
    per_row_alpha = alpha_map.shape[0] == n and n > 1

    tgt2d = jnp.asarray(target).reshape(n, 1).astype(jnp.int32)

    if tile_n is None:
        tile_n = _pick_tile_n(n, c, output.dtype.itemsize)
    tile_n = max(8, (int(tile_n) // 8) * 8)
    grid_n = pl.cdiv(n, tile_n)

    logits_spec = pl.BlockSpec((tile_n, c), lambda i: (i, 0))
    tgt_spec = pl.BlockSpec((tile_n, 1), lambda i: (i, 0))
    if per_row_alpha:
        alpha_spec = pl.BlockSpec((tile_n, c), lambda i: (i, 0))
    else:
        # same (1, C) class-alpha row reused by every row tile
        alpha_spec = pl.BlockSpec((1, c), lambda i: (0, 0))

    kernel = functools.partial(focal_loss_kernel, gamma=float(gamma), n_total=n)

    loss = pl.pallas_call(
        kernel,
        out_shape=jax.ShapeDtypeStruct((1, 1), jnp.float32),
        grid=(grid_n,),
        in_specs=[logits_spec, tgt_spec, alpha_spec],
        # accumulator: same (1,1) block across the whole grid, written back once
        out_specs=pl.BlockSpec((1, 1), lambda i: (0, 0)),
        compiler_params=pltpu.CompilerParams(
            dimension_semantics=("arbitrary",),
            vmem_limit_bytes=64 * 1024 * 1024,
        ),
    )(output, tgt2d, alpha_map)
    return loss[0, 0]


def focal_loss_ref(output, target, alpha_map, gamma):
    # pure-JAX reference of the PyTorch forward
    output = jnp.asarray(output).astype(jnp.float32)
    alpha_map = jnp.asarray(alpha_map)
    p = jax.nn.softmax(output, axis=1)
    logp = jax.nn.log_softmax(output, axis=1)
    idx = jnp.arange(output.shape[0])
    pt = p[idx, target]
    log_pt = logp[idx, target]
    if alpha_map.ndim == 1:
        alpha = alpha_map[target]
    elif alpha_map.shape[0] == 1:
        alpha = alpha_map[0, target]
    else:
        alpha = alpha_map[idx, target]
    return jnp.mean(alpha.astype(jnp.float32) * jnp.power(1.0 - pt, gamma) * (-log_pt))


if __name__ == "__main__":
    N, C = 16, 128
    gamma = 2.0

    key = jax.random.PRNGKey(0)
    k_out, k_tgt, k_alpha = jax.random.split(key, 3)

    output = jax.random.normal(k_out, (N, C), dtype=jnp.float32)
    target = jax.random.randint(k_tgt, (N,), 0, C, dtype=jnp.int32)

    # common FocalLoss setup: per-class alpha row; the PyTorch module's (N, C)
    # alpha_map is this row broadcast over the batch.
    class_alpha = 0.25 + 0.5 * (jnp.arange(C, dtype=jnp.float32) / C)

    # tile_n=8 -> 2 grid steps, exercises the accumulating grid + finalize path
    loss = focal_loss(output, target, class_alpha, gamma, tile_n=8)
    jax.block_until_ready(loss)
    ref = focal_loss_ref(output, target, class_alpha, gamma)
    assert jnp.allclose(loss, ref, rtol=1e-5, atol=1e-6), (loss, ref)

    # also exercise the general per-sample (N, C) alpha_map path of the module
    alpha_map_full = jax.random.uniform(k_alpha, (N, C), dtype=jnp.float32)
    loss2 = focal_loss(output, target, alpha_map_full, gamma, tile_n=8)
    jax.block_until_ready(loss2)
    ref2 = focal_loss_ref(output, target, alpha_map_full, gamma)
    assert jnp.allclose(loss2, ref2, rtol=1e-5, atol=1e-6), (loss2, ref2)

    print("KERNEL_OK")
</pallas_src>

<mosaic_0001>
module attributes {stable_mosaic.version = 11 : i64} {
  func.func @focal_loss_kernel(%arg0: i32, %arg1: memref<8x128xf32, #tpu.memory_space<vmem>>, %arg2: memref<8x1xi32, #tpu.memory_space<vmem>>, %arg3: memref<1x128xf32, #tpu.memory_space<vmem>>, %arg4: memref<1x1xf32, #tpu.memory_space<vmem>>) attributes {dimension_semantics = [#tpu.dimension_semantics<arbitrary>], iteration_bounds = array<i64: 2>, scalar_prefetch = 0 : i64, scratch_operands = 0 : i64, tpu.core_type = #tpu.core_type<tc>, window_params = [{transform_indices = @transform_0, window_bounds = array<i64: 8, 128>}, {transform_indices = @transform_1, window_bounds = array<i64: 8, 1>}, {pipeline_mode = #tpu.pipeline_mode<synchronous>, transform_indices = @transform_2, window_bounds = array<i64: 1, 128>}, {pipeline_mode = #tpu.pipeline_mode<synchronous>, transform_indices = @transform_3, window_bounds = array<i64: 1, 1>}]} {
    %c0_i32 = arith.constant 0 : i32
    %0 = arith.cmpi eq, %arg0, %c0_i32 : i32
    %1 = arith.extui %0 : i1 to i32
    %c0_i32_0 = arith.constant 0 : i32
    %2 = arith.cmpi ne, %1, %c0_i32_0 : i32
    scf.if %2 {
      %cst_21 = arith.constant 0.000000e+00 : f32
      %54 = vector.broadcast %cst_21 : f32 to vector<1x1xf32>
      %c0_22 = arith.constant 0 : index
      %c0_23 = arith.constant 0 : index
      %55 = vector.load %arg4[%c0_22, %c0_23] : memref<1x1xf32, #tpu.memory_space<vmem>>, vector<1x1xf32>
      tpu.vector_store %arg4[%c0_22, %c0_23], %54 {strides = array<i32>} : memref<1x1xf32, #tpu.memory_space<vmem>>, vector<1x1xf32>,
    } else {
    }
    %c0 = arith.constant 0 : index
    %c0_1 = arith.constant 0 : index
    %3 = vector.load %arg1[%c0, %c0_1] : memref<8x128xf32, #tpu.memory_space<vmem>>, vector<8x128xf32>
    %c0_2 = arith.constant 0 : index
    %c0_3 = arith.constant 0 : index
    %4 = vector.load %arg2[%c0_2, %c0_3] : memref<8x1xi32, #tpu.memory_space<vmem>>, vector<8x1xi32>
    %c0_4 = arith.constant 0 : index
    %c0_5 = arith.constant 0 : index
    %5 = vector.load %arg3[%c0_4, %c0_5] : memref<1x128xf32, #tpu.memory_space<vmem>>, vector<1x128xf32>
    %cst = arith.constant dense<0xFF800000> : vector<8xf32>
    %6 = vector.multi_reduction <maximumf>, %3, %cst [1] : vector<8x128xf32> to vector<8xf32>
    %7 = vector.shape_cast %6 : vector<8xf32> to vector<8x1xf32>
    %8 = vector.broadcast %7 : vector<8x1xf32> to vector<8x128xf32>
    %9 = arith.subf %3, %8 : vector<8x128xf32>
    %10 = math.exp %9 : vector<8x128xf32>
    %cst_6 = arith.constant dense<0.000000e+00> : vector<8xf32>
    %11 = vector.multi_reduction <add>, %10, %cst_6 [1] : vector<8x128xf32> to vector<8xf32>
    %12 = vector.shape_cast %11 : vector<8xf32> to vector<8x1xf32>
    %13 = math.log %12 : vector<8x1xf32>
    %14 = tpu.iota {dimensions = array<i32: 1>} : vector<8x128xi32>
    %15 = vector.broadcast %4 : vector<8x1xi32> to vector<8x128xi32>
    %16 = arith.cmpi eq, %14, %15 : vector<8x128xi32>
    %cst_7 = arith.constant 0.000000e+00 : f32
    %17 = vector.broadcast %cst_7 : f32 to vector<8x128xf32>
    %18 = arith.select %16, %9, %17 : vector<8x128xi1>, vector<8x128xf32>
    %cst_8 = arith.constant dense<0.000000e+00> : vector<8xf32>
    %19 = vector.multi_reduction <add>, %18, %cst_8 [1] : vector<8x128xf32> to vector<8xf32>
    %20 = vector.shape_cast %19 : vector<8xf32> to vector<8x1xf32>
    %cst_9 = arith.constant 0.000000e+00 : f32
    %21 = vector.shape_cast %5 : vector<1x128xf32> to vector<1x128xf32>
    %22 = vector.broadcast %21 : vector<1x128xf32> to vector<8x128xf32>
    %23 = vector.broadcast %cst_9 : f32 to vector<8x128xf32>
    %24 = arith.select %16, %22, %23 : vector<8x128xi1>, vector<8x128xf32>
    %cst_10 = arith.constant dense<0.000000e+00> : vector<8xf32>
    %25 = vector.multi_reduction <add>, %24, %cst_10 [1] : vector<8x128xf32> to vector<8xf32>
    %26 = vector.shape_cast %25 : vector<8xf32> to vector<8x1xf32>
    %27 = arith.subf %20, %13 : vector<8x1xf32>
    %28 = math.exp %27 : vector<8x1xf32>
    %cst_11 = arith.constant 1.000000e+00 : f32
    %29 = vector.broadcast %cst_11 : f32 to vector<8x1xf32>
    %30 = arith.subf %29, %28 : vector<8x1xf32>
    %cst_12 = arith.constant 1.000000e+00 : f32
    %31 = vector.broadcast %cst_12 : f32 to vector<8x1xf32>
    %32 = arith.mulf %31, %30 : vector<8x1xf32>
    %33 = arith.mulf %32, %30 : vector<8x1xf32>
    %34 = arith.mulf %26, %33 : vector<8x1xf32>
    %cst_13 = arith.constant 0.000000e+00 : f32
    %35 = vector.broadcast %cst_13 : f32 to vector<8x1xf32>
    %36 = arith.subf %35, %27 : vector<8x1xf32>
    %37 = arith.mulf %34, %36 : vector<8x1xf32>
    %c8_i32 = arith.constant 8 : i32
    %38 = arith.muli %arg0, %c8_i32 : i32
    %39 = tpu.iota {dimensions = array<i32: 0>} : vector<8x1xi32>
    %40 = vector.broadcast %38 : i32 to vector<8x1xi32>
    %41 = arith.addi %40, %39 : vector<8x1xi32>
    %c16_i32 = arith.constant 16 : i32
    %42 = vector.broadcast %c16_i32 : i32 to vector<8x1xi32>
    %43 = arith.cmpi slt, %41, %42 : vector<8x1xi32>
    %cst_14 = arith.constant 0.000000e+00 : f32
    %44 = vector.broadcast %cst_14 : f32 to vector<8x1xf32>
    %45 = arith.select %43, %37, %44 : vector<8x1xi1>, vector<8x1xf32>
    %c0_15 = arith.constant 0 : index
    %c0_16 = arith.constant 0 : index
    %46 = vector.load %arg4[%c0_15, %c0_16] : memref<1x1xf32, #tpu.memory_space<vmem>>, vector<1x1xf32>
    %cst_17 = arith.constant dense<0.000000e+00> : vector<1xf32>
    %47 = vector.multi_reduction <add>, %45, %cst_17 [0] : vector<8x1xf32> to vector<1xf32>
    %48 = vector.shape_cast %47 : vector<1xf32> to vector<1x1xf32>
    %49 = arith.addf %46, %48 : vector<1x1xf32>
    %c0_18 = arith.constant 0 : index
    %c0_19 = arith.constant 0 : index
    %50 = vector.load %arg4[%c0_18, %c0_19] : memref<1x1xf32, #tpu.memory_space<vmem>>, vector<1x1xf32>
    tpu.vector_store %arg4[%c0_18, %c0_19], %49 {strides = array<i32>} : memref<1x1xf32, #tpu.memory_space<vmem>>, vector<1x1xf32>,
    %c1_i32 = arith.constant 1 : i32
    %51 = arith.cmpi eq, %arg0, %c1_i32 : i32
    %52 = arith.extui %51 : i1 to i32
    %c0_i32_20 = arith.constant 0 : i32
    %53 = arith.cmpi ne, %52, %c0_i32_20 : i32
    scf.if %53 {
      %c0_21 = arith.constant 0 : index
      %c0_22 = arith.constant 0 : index
      %54 = vector.load %arg4[%c0_21, %c0_22] : memref<1x1xf32, #tpu.memory_space<vmem>>, vector<1x1xf32>
      %cst_23 = arith.constant 6.250000e-02 : f32
      %55 = vector.broadcast %cst_23 : f32 to vector<1x1xf32>
      %56 = arith.mulf %54, %55 : vector<1x1xf32>
      %c0_24 = arith.constant 0 : index
      %c0_25 = arith.constant 0 : index
      %57 = vector.load %arg4[%c0_24, %c0_25] : memref<1x1xf32, #tpu.memory_space<vmem>>, vector<1x1xf32>
      tpu.vector_store %arg4[%c0_24, %c0_25], %56 {strides = array<i32>} : memref<1x1xf32, #tpu.memory_space<vmem>>, vector<1x1xf32>,
    } else {
    }
    return
  }
  func.func @transform_0(%arg0: i32) -> (i32, i32) {
    %c0_i32 = arith.constant 0 : i32
    %c0_i32_0 = arith.constant 0 : i32
    return %arg0, %c0_i32 : i32, i32
  }
  func.func @transform_1(%arg0: i32) -> (i32, i32) {
    %c0_i32 = arith.constant 0 : i32
    %c0_i32_0 = arith.constant 0 : i32
    return %arg0, %c0_i32 : i32, i32
  }
  func.func @transform_2(%arg0: i32) -> (i32, i32) {
    %c0_i32 = arith.constant 0 : i32
    %c0_i32_0 = arith.constant 0 : i32
    %c0_i32_1 = arith.constant 0 : i32
    return %c0_i32, %c0_i32_0 : i32, i32
  }
  func.func @transform_3(%arg0: i32) -> (i32, i32) {
    %c0_i32 = arith.constant 0 : i32
    %c0_i32_0 = arith.constant 0 : i32
    %c0_i32_1 = arith.constant 0 : i32
    return %c0_i32, %c0_i32_0 : i32, i32
  }
}

</mosaic_0001>

<llo_original>
// kernel: tpu_custom_call.1
$region0: #{tpu_custom_call.1}
  #allocation0 [shape = 'u32[]', space=smem, size = 0x4, offset = 0x4, fixed_abs, tag = 'smem constant byte address 0x4 - core index']
  #allocation1 [shape = 'u32[144,128]{1,0:T(1,128)}', space=vmem, size = 0x12000, scoped, tag = 'internal scratch']
  %s0 = inlined_call_operand.vmem [shape: f32[16,128], index: 0, kind: input, shape index: {}]
  %s1 = inlined_call_operand.vmem [shape: s32[16,1], index: 1, kind: input, shape index: {}]
  %s2 = inlined_call_operand.vmem [shape: f32[1,128], index: 2, kind: input, shape index: {}]
  %s3 = inlined_call_operand.hbm [shape: f32[1,1], index: 3, kind: output, shape index: {}]
  %s4 = sld [smem:[#allocation0]]
  $region53: #{tpu_custom_call.1} parent=0
    _
  %s6 = ssub.s32 1, %s4
  %s7 = scalar_select 0, %s6, %s4
  $region1: #{tpu_custom_call.1} parent=0
    #allocation2 [shape = 'u8[512]{0}', space=vmem, size = 0x400, scoped, tag = 'output window, operand 0, single buffered']
    #allocation3 [shape = 's32[2]{0}', space=sflag, size = 0x8, scoped, tag = 'scoped memory for tpu_custom_call.1']
    %8 = vsyncpa [#allocation3], 0
    loop: start=0, step=1, limit=4
    $region2: #{tpu_custom_call.1} parent=1 // loop_pre_header
      _
    $region3: #{tpu_custom_call.1} parent=1 // loop_header
      %s10 = sphi 0, %s14
      %p11 = scmp.ge.s32.totalorder %s10, 4
      %s20 = sphi 0, %s22
      %s23 = sphi 0, %s20
      %s24 = sphi 0, %s23
      %s40 = sphi 0, %s24
      %s46 = sphi 0, %s48
      %s49 = sphi 0, %s46
      %s50 = sphi 0, %s49
      %s66 = sphi 0, %s50
      %s70 = sphi 0, %s70
      %s72 = sphi 0, %s70
      %s73 = sphi 0, %s72
      %s87 = sphi 0, %s73
      %s91 = sphi 0, %s91
      %s93 = sphi 0, %s91
      %s94 = sphi 0, %s93
      %s108 = sphi 0, %s94
    $region4: #{tpu_custom_call.1} parent=1 // loop_header_branch
      %13 = sbr.rel (%p11) target = $region8
    $region5: #{tpu_custom_call.1} parent=1 // loop_body
      %s15 = ssub.s32 %s10, 1
      %s16 = ssub.s32 %s10, 2
      %s17 = sadd.s32 %s10, 1
      %s18 = ssub.s32 %s10, %s17
      %p19 = scmp.eq.s32.totalorder %s18, 0
      %s21 = sadd.s32 %s20, 1
      %s22 = scalar_select %p19, %s20, %s21
      %p25 = pneg %p19
      %p26 = scmp.eq.s32.totalorder %s10, 1
      %p27 = por %p25, %p26
      %p28 = scmp.ne.s32.totalorder %s20, %s23
      %p29 = scmp.eq.s32.totalorder %s10, 0
      %p30 = por %p28, %p29
      %p31 = scmp.ne.s32.totalorder %s20, %s23
      %p32 = scmp.eq.s32.totalorder %s15, 1
      %p33 = por %p31, %p32
      %p34 = scmp.ne.s32.totalorder %s23, %s24
      %p35 = scmp.eq.s32.totalorder %s15, 0
      %p36 = por %p34, %p35
      %p37 = scmp.ne.s32.totalorder %s23, %s24
      %p38 = scmp.eq.s32.totalorder %s16, 1
      %p39 = por %p37, %p38
      %p41 = scmp.ne.s32.totalorder %s24, %s40
      %p42 = scmp.eq.s32.totalorder %s16, 0
      %p43 = por %p41, %p42
      %s44 = ssub.s32 %s10, %s17
      %p45 = scmp.eq.s32.totalorder %s44, 0
      %s47 = sadd.s32 %s46, 1
      %s48 = scalar_select %p45, %s46, %s47
      %p51 = pneg %p45
      %p52 = scmp.eq.s32.totalorder %s10, 1
      %p53 = por %p51, %p52
      %p54 = scmp.ne.s32.totalorder %s46, %s49
      %p55 = scmp.eq.s32.totalorder %s10, 0
      %p56 = por %p54, %p55
      %p57 = scmp.ne.s32.totalorder %s46, %s49
      %p58 = scmp.eq.s32.totalorder %s15, 1
      %p59 = por %p57, %p58
      %p60 = scmp.ne.s32.totalorder %s49, %s50
      %p61 = scmp.eq.s32.totalorder %s15, 0
      %p62 = por %p60, %p61
      %p63 = scmp.ne.s32.totalorder %s49, %s50
      %p64 = scmp.eq.s32.totalorder %s16, 1
      %p65 = por %p63, %p64
      %p67 = scmp.ne.s32.totalorder %s50, %s66
      %p68 = scmp.eq.s32.totalorder %s16, 0
      %p69 = por %p67, %p68
      %s71 = sadd.s32 %s70, 1
      %p74 = scmp.eq.s32.totalorder %s10, 1
      %p75 = scmp.ne.s32.totalorder %s70, %s72
      %p76 = scmp.eq.s32.totalorder %s10, 0
      %p77 = por %p75, %p76
      %p78 = scmp.ne.s32.totalorder %s70, %s72
      %p79 = scmp.eq.s32.totalorder %s15, 1
      %p80 = por %p78, %p79
      %p81 = scmp.ne.s32.totalorder %s72, %s73
      %p82 = scmp.eq.s32.totalorder %s15, 0
      %p83 = por %p81, %p82
      %p84 = scmp.ne.s32.totalorder %s72, %s73
      %p85 = scmp.eq.s32.totalorder %s16, 1
      %p86 = por %p84, %p85
      %p88 = scmp.ne.s32.totalorder %s73, %s87
      %p89 = scmp.eq.s32.totalorder %s16, 0
      %p90 = por %p88, %p89
      %s92 = sadd.s32 %s91, 1
      %p95 = scmp.eq.s32.totalorder %s10, 1
      %p96 = scmp.ne.s32.totalorder %s91, %s93
      %p97 = scmp.eq.s32.totalorder %s10, 0
      %p98 = por %p96, %p97
      %p99 = scmp.ne.s32.totalorder %s91, %s93
      %p100 = scmp.eq.s32.totalorder %s15, 1
      %p101 = por %p99, %p100
      %p102 = scmp.ne.s32.totalorder %s93, %s94
      %p103 = scmp.eq.s32.totalorder %s15, 0
      %p104 = por %p102, %p103
      %p105 = scmp.ne.s32.totalorder %s93, %s94
      %p106 = scmp.eq.s32.totalorder %s16, 1
      %p107 = por %p105, %p106
      %p109 = scmp.ne.s32.totalorder %s94, %s108
      %p110 = scmp.eq.s32.totalorder %s16, 0
      %p111 = por %p109, %p110
      %p112 = scmp.le.s32.totalorder 1, %s10
      %p113 = scmp.lt.s32.totalorder %s10, 3
      %p114 = pnand %p112, %p113
      %p115 = pneg %p114
      // Predicated region
      $region9: #{tpu_custom_call.1} parent=5 // pred_check
        _
      $region10: #{tpu_custom_call.1} parent=5 // pred_check_branch
        %117 = sbr.rel (%p114) target = $region12
      $region11: #{tpu_custom_call.1} parent=5 // pred_region
        %s118 = ssub.s32 %s10, 1
        // Predicated region
        $region13: #{tpu_custom_call.1} parent=11 // pred_check
          %p119 = pneg %p83
        $region14: #{tpu_custom_call.1} parent=11 // pred_check_branch
          %121 = sbr.rel (%p119) target = $region16
        $region15: #{tpu_custom_call.1} parent=11 // pred_region
          _
        $region16: #{tpu_custom_call.1} parent=11 // pred_fallthru
          _
      $region12: #{tpu_custom_call.1} parent=5 // pred_fallthru
        _
      %p122 = scmp.lt.s32.totalorder %s10, 2
      // Predicated region
      $region17: #{tpu_custom_call.1} parent=5 // pred_check
        %p123 = pneg %p122
      $region18: #{tpu_custom_call.1} parent=5 // pred_check_branch
        %125 = sbr.rel (%p123) target = $region20
      $region19: #{tpu_custom_call.1} parent=5 // pred_region
        // Predicated region
        $region21: #{tpu_custom_call.1} parent=19 // pred_check
          %p126 = pneg %p30
        $region22: #{tpu_custom_call.1} parent=19 // pred_check_branch
          %128 = sbr.rel (%p126) target = $region24
        $region23: #{tpu_custom_call.1} parent=19 // pred_region
          %p129 = scmp.lt.s32.totalorder %s10, 1
          %s130 = scalar_select %p129, %s10, 1
          %s131 = smul.addr %s130, 8
          %s132 = scalar_lea.vmem %s0, %s131
        $region24: #{tpu_custom_call.1} parent=19 // pred_fallthru
          _
        // Predicated region
        $region25: #{tpu_custom_call.1} parent=19 // pred_check
          %p133 = pneg %p56
        $region26: #{tpu_custom_call.1} parent=19 // pred_check_branch
          %135 = sbr.rel (%p133) target = $region28
        $region27: #{tpu_custom_call.1} parent=19 // pred_region
          %p136 = scmp.lt.s32.totalorder %s10, 1
          %s137 = scalar_select %p136, %s10, 1
          %s138 = smul.addr %s137, 8
          %s139 = scalar_lea.vmem %s1, %s138
        $region28: #{tpu_custom_call.1} parent=19 // pred_fallthru
          _
      $region20: #{tpu_custom_call.1} parent=5 // pred_fallthru
        _
      %p140 = scmp.le.s32.totalorder 1, %s10
      %p141 = scmp.lt.s32.totalorder %s10, 3
      %p142 = pnand %p140, %p141
      %p143 = pneg %p142
      // Predicated region
      $region29: #{tpu_custom_call.1} parent=5 // pred_check
        _
      $region30: #{tpu_custom_call.1} parent=5 // pred_check_branch
        %145 = sbr.rel (%p142) target = $region32
      $region31: #{tpu_custom_call.1} parent=5 // pred_region
        %s146 = ssub.s32 %s10, 1
        %p147 = scmp.lt.s32.totalorder %s15, 1
        %s148 = scalar_select %p147, %s15, 1
        %s149 = smul.addr %s148, 8
        %s150 = scalar_lea.vmem %s0, %s149
        %p151 = pneg %p36
        %p152 = pneg %p33
        %p153 = scmp.lt.s32.totalorder %s15, 1
        %s154 = scalar_select %p153, %s15, 1
        %s155 = smul.addr %s154, 8
        %s156 = scalar_lea.vmem %s1, %s155
        %p157 = pneg %p62
        %p158 = pneg %p59
        %p159 = pneg %p83
        %p160 = pneg %p80
        %p161 = pneg %p104
        %p162 = pneg %p101
        %p163 = scmp.lt.s32.totalorder %s15, 1
        %s164 = scalar_select %p163, %s15, 1
        %s165 = smul.addr %s164, 8
        %s166 = scalar_lea.vmem %s0, %s165
        %p167 = scmp.lt.s32.totalorder %s15, 1
        %s168 = scalar_select %p167, %s15, 1
        %s169 = smul.addr %s168, 8
        %s170 = scalar_lea.vmem %s1, %s169
        %p171 = scmp.eq.s32.totalorder %s15, 0
        // Predicated region
        $region33: #{tpu_custom_call.1} parent=31 // pred_check
          %p172 = pneg %p171
        $region34: #{tpu_custom_call.1} parent=31 // pred_check_branch
          %174 = sbr.rel (%p172) target = $region36
        $region35: #{tpu_custom_call.1} parent=31 // pred_region
          %vm175 = vcmask 0
          %176 = vst.msk [vmem:[#allocation2] sm:$0x1] %vm175, 0.0
        $region36: #{tpu_custom_call.1} parent=31 // pred_fallthru
          _
        %v177 = vld [vmem:[%s166] sm:$0xff]
        %v178 = vld [vmem:[%s170] sm:$0xff]
        %v179 = vld [vmem:[%s2] sm:$0x1]
        %180 = vmax.xlane.f32.xlu0 %v177
        %v181 = vpop.xlane.xlu0 %180
        %v182 = vsub.f32 %v177, %v181
        %v183 = vmul.f32 %v182, 1.442695
        %v184 = vpow.pop %v183
        %185 = vadd.xlane.f32.xlu0 %v184
        %v186 = vpop.xlane.xlu0 %185
        %v187 = vlog2.pop %v186
        %v188 = vmul.f32 %v187, 0.6931472
        %v189 = vlaneseq
        %v190 = vand.u32 %v189, 127
        %191 = vset.pattern.permute.xlu0 0
        %192 = vperm.xlu0 %191, %v178
        %v193 = vpop.permute.xlu0 %192
        %vm194 = vcmp.eq.s32.totalorder %v190, %v193
        %v195 = vsel %vm194, %v182, 0.0
        %196 = vadd.xlane.f32.xlu0 %v195
        %v197 = vpop.xlane.xlu0 %196
        %v199 = vlaneseq
        %v200 = vshrl.u32 %v199, 7
        %v201 = vsub.s32 0, %v200
        %v202 = vrot.slane %v179, %v201
        %v204 = vsel %vm194, %v202, 0.0
        %205 = vadd.xlane.f32.xlu0 %v204
        %v206 = vpop.xlane.xlu0 %205
        %v207 = vsub.f32 %v197, %v188
        %v208 = vmul.f32 %v207, 1.442695
        %v209 = vpow.pop %v208
        %v210 = vsub.f32 1.0, %v209
        %v211 = vmul.f32 %v210, %v210
        %v212 = vmul.f32 %v206, %v211
        %v213 = vsub.f32 0.0, %v207
        %v214 = vmul.f32 %v212, %v213
        %s215 = smul.u32 %s15, 8
        %v216 = vlaneseq
        %v217 = vshrl.u32 %v216, 7
        %v218 = vstv %s215
        %v219 = vadd.s32 %v218, %v217
        %vm220 = vcmp.lt.s32.totalorder %v219, 16
        %v221 = vsel %vm220, %v214, 0.0
        %v222 = vld [vmem:[#allocation2] sm:$0x1]
        %v223 = vrot.slane %v221, 4
        %v224 = vadd.f32 %v221, %v223
        %v225 = vrot.slane %v224, 2
        %v226 = vadd.f32 %v224, %v225
        %v227 = vrot.slane %v226, 1
        %v228 = vadd.f32 %v226, %v227
        %v229 = vadd.f32 %v222, %v228
        %vm230 = vcmask 0
        %231 = vst.msk [vmem:[#allocation2] sm:$0x1] %vm230, %v229
        %p232 = scmp.eq.s32.totalorder %s15, 1
        // Predicated region
        $region37: #{tpu_custom_call.1} parent=31 // pred_check
          %p233 = pneg %p232
        $region38: #{tpu_custom_call.1} parent=31 // pred_check_branch
          %235 = sbr.rel (%p233) target = $region40
        $region39: #{tpu_custom_call.1} parent=31 // pred_region
          %v236 = vld [vmem:[#allocation2] sm:$0x1]
          %v237 = vmul.f32 %v236, 0.0625
          %238 = vst.msk [vmem:[#allocation2] sm:$0x1] %vm230, %v237
        $region40: #{tpu_custom_call.1} parent=31 // pred_fallthru
          _
        // Predicated region
        $region41: #{tpu_custom_call.1} parent=31 // pred_check
          %p239 = pneg %p101
        $region42: #{tpu_custom_call.1} parent=31 // pred_check_branch
          %241 = sbr.rel (%p239) target = $region44
        $region43: #{tpu_custom_call.1} parent=31 // pred_region
          %s243 = ssub.s32 16, 16
          %244 = vsyncadd [#allocation3], %s243
          %s246 = sshll.u32 [#allocation2], 4
          %s247 = int_to_ptr.vmem [resolvable:$true] %s246
          %249 = dma.vmem_to_hbm [thread:$0]  %s247, 16, %s3, [#allocation3]
        $region44: #{tpu_custom_call.1} parent=31 // pred_fallthru
          _
        // Predicated region
        $region45: #{tpu_custom_call.1} parent=31 // pred_check
          %p250 = pneg %p101
        $region46: #{tpu_custom_call.1} parent=31 // pred_check_branch
          %252 = sbr.rel (%p250) target = $region48
        $region47: #{tpu_custom_call.1} parent=31 // pred_region
          %253 = dma.done [#allocation3], 16
        $region48: #{tpu_custom_call.1} parent=31 // pred_fallthru
          _
      $region32: #{tpu_custom_call.1} parent=5 // pred_fallthru
        _
      %p254 = scmp.le.s32.totalorder 2, %s10
      // Predicated region
      $region49: #{tpu_custom_call.1} parent=5 // pred_check
        %p255 = pneg %p254
      $region50: #{tpu_custom_call.1} parent=5 // pred_check_branch
        %257 = sbr.rel (%p255) target = $region52
      $region51: #{tpu_custom_call.1} parent=5 // pred_region
        %s258 = ssub.s32 %s10, 2
      $region52: #{tpu_custom_call.1} parent=5 // pred_fallthru
        _
    $region6: #{tpu_custom_call.1} parent=1 // loop_footer
      %s14 = sadd.s32 1, %s10
    $region7: #{tpu_custom_call.1} parent=1 // loop_footer_branch
      %9 = sbr.rel target = $region3
    $region8: #{tpu_custom_call.1} parent=1 // loop_exit
      _
    %259 = vsyncpa [#allocation3], 1
    %s260 = scalar_lea.sflag [#allocation3], 1
    %261 = vsyncpa %s260, 1

</llo_original>
